<compile_context>
chip_gen: v6e
topology: v6e:2x2x1
jax: 0.10.0
libtpu: 0.0.40
codegen_flags: <defaults>
</compile_context>

<pallas_src>
import jax
import jax.numpy as jnp
from jax.experimental import pallas as pl
from jax.experimental.pallas import tpu as pltpu


def _ngram_kernel(x_ref, w_ref, b_ref, o_ref):
    # x_ref: (TB, S, E)   bf16 raw embeddings for TB batch elements
    # w_ref: (K, E, C)    bf16 conv filters (E-major, channels last = lane-dense)
    # b_ref: (1, C)       f32 bias
    # o_ref: (TB, C)      f32 pooled output
    TB, S, E = x_ref.shape
    K, _, C = w_ref.shape
    L = S - K + 1

    # Flatten batch into sublanes: S is a multiple of the sublane tile, so the
    # reshape is layout-preserving.
    xf = x_ref[...].reshape(TB * S, E)

    # conv[b, l, c] = sum_k  x[b, l+k, :] @ w[k]
    # K small MXU matmuls (f32 accumulation), combined with static sublane
    # offsets.  MXU is nowhere near saturated (kernel is DMA-bound), so skinny
    # contractions are irrelevant.
    acc = None
    for k in range(K):
        zk = jnp.dot(xf, w_ref[k], preferred_element_type=jnp.float32)
        zk = zk.reshape(TB, S, C)[:, k:k + L, :]          # (TB, L, C)
        acc = zk if acc is None else acc + zk

    # Max-pool over the L window positions, THEN bias + ReLU (exact reorder:
    # ReLU monotone, bias constant over L) — epilogue work shrinks by Lx.
    m = jnp.max(acc, axis=1)                              # (TB, C)
    o_ref[...] = jnp.maximum(m + b_ref[...], 0.0).astype(o_ref.dtype)


def _choose_batch_tile(B, batch_tile):
    """Pick TB: big enough to amortize step overhead, but keep >= 2 grid steps
    for large B so v7x's two TensorCores both get work; multiple of 8 when
    the grid has more than one step (output block sublane alignment)."""
    if B <= 8:
        return B                       # single tiny step; padding not worth it
    half = (B + 1) // 2                # ceil(B/2) -> at least 2 grid steps
    tb = min(batch_tile, ((half + 7) // 8) * 8)
    return max(8, min(tb, ((B + 7) // 8) * 8))


def ngram_block_forward(x_nchw, weight, bias, *, batch_tile=128,
                        compute_dtype=jnp.bfloat16, use_pallas=None):
    """x_nchw: (B, 1, S, E); weight: (C, 1, K, E) [PyTorch layout]; bias: (C,).

    Returns (B, C) == x.view(-1, 128) of the PyTorch module.
    """
    B, _, S, E = x_nchw.shape
    C, _, K, _ = weight.shape
    L = S - K + 1
    assert L >= 1

    if use_pallas is None:
        use_pallas = B >= 16           # tiny batch: launch-bound, use fused XLA
    if not use_pallas:
        return _reference_forward(x_nchw, weight, bias)

    # ---- layout plumbing only (no im2col, no duplication) -------------------
    x_bse = x_nchw[:, 0, :, :].astype(compute_dtype)           # (B, S, E)
    w_kec = jnp.transpose(weight[:, 0], (1, 2, 0)).astype(compute_dtype)  # (K,E,C)
    b_2d = bias.reshape(1, C).astype(jnp.float32)

    # ---- batch tiling --------------------------------------------------------
    TB = _choose_batch_tile(B, batch_tile)
    Bp = ((B + TB - 1) // TB) * TB
    if Bp != B:
        x_bse = jnp.pad(x_bse, ((0, Bp - B), (0, 0), (0, 0)))  # zero batch rows
    grid = (Bp // TB,)

    bytes_accessed = (Bp * S * E * x_bse.dtype.itemsize
                      + K * E * C * w_kec.dtype.itemsize
                      + C * 4 + Bp * C * 4)
    cost = pl.CostEstimate(flops=2 * Bp * L * K * E * C,
                           transcendentals=0,
                           bytes_accessed=bytes_accessed)

    out = pl.pallas_call(
        _ngram_kernel,
        out_shape=jax.ShapeDtypeStruct((Bp, C), jnp.float32),
        grid_spec=pltpu.PrefetchScalarGridSpec(
            num_scalar_prefetch=0,
            grid=grid,
            in_specs=[
                pl.BlockSpec((TB, S, E), lambda b: (b, 0, 0)),
                # Constant block index -> weights/bias DMA'd once, stay resident.
                pl.BlockSpec((K, E, C), lambda b: (0, 0, 0)),
                pl.BlockSpec((1, C), lambda b: (0, 0)),
            ],
            out_specs=pl.BlockSpec((TB, C), lambda b: (b, 0)),
        ),
        compiler_params=pltpu.CompilerParams(
            dimension_semantics=("parallel",),   # megacore-shardable on v7x
        ),
        cost_estimate=cost,
    )(x_bse, w_kec, b_2d)

    return out[:B]                                               # (B, C)


def _reference_forward(x_nchw, weight, bias):
    """Pure-JAX reference reproducing the PyTorch module semantics (f32)."""
    B, _, S, E = x_nchw.shape
    C, _, K, _ = weight.shape
    L = S - K + 1
    windows = jnp.stack([x_nchw[:, 0, i:i + L, :] for i in range(K)], axis=2)
    conv = jnp.einsum("blke,cke->bcl", windows, weight[:, 0]) + bias[None, :, None]
    conv = jnp.maximum(conv, 0.0)
    return jnp.max(conv, axis=-1)                                # (B, C)


if __name__ == "__main__":
    # Module-consistent shapes: input_size=16 (seq), kernel=(3, 32), channels=128
    S, E, K, C = 16, 32, 3, 128
    key = jax.random.PRNGKey(0)
    kx, kw, kb = jax.random.split(key, 3)

    weight = jax.random.normal(kw, (C, 1, K, E), dtype=jnp.float32) * 0.1
    bias = jax.random.normal(kb, (C,), dtype=jnp.float32) * 0.1

    # Case 1: shipped tiny batch, forced through the Pallas kernel
    # (auto-dispatch would route B=2 to the fused XLA path).
    B = 2
    x = jax.random.normal(kx, (B, 1, S, E), dtype=jnp.float32)
    out = jax.block_until_ready(ngram_block_forward(x, weight, bias, use_pallas=True))
    ref = jax.block_until_ready(_reference_forward(x, weight, bias))
    assert out.shape == (B, 128), out.shape
    # bf16 inputs vs f32 reference -> relaxed tolerance.
    assert jnp.allclose(out, ref, rtol=5e-2, atol=5e-2), float(jnp.max(jnp.abs(out - ref)))

    # Case 2: batch not divisible by the tile (exercises batch padding and
    # >= 2 "parallel" grid steps).
    B2 = 20
    x2 = jax.random.normal(jax.random.PRNGKey(1), (B2, 1, S, E), dtype=jnp.float32)
    out2 = jax.block_until_ready(ngram_block_forward(x2, weight, bias))
    ref2 = jax.block_until_ready(_reference_forward(x2, weight, bias))
    assert out2.shape == (B2, 128), out2.shape
    assert jnp.allclose(out2, ref2, rtol=5e-2, atol=5e-2), float(jnp.max(jnp.abs(out2 - ref2)))

    print("KERNEL_OK")
</pallas_src>

<mosaic_0001>
module attributes {stable_mosaic.version = 11 : i64} {
  func.func @_ngram_kernel(%arg0: i32, %arg1: memref<2x16x32xbf16, #tpu.memory_space<vmem>>, %arg2: memref<3x32x128xbf16, #tpu.memory_space<vmem>>, %arg3: memref<1x128xf32, #tpu.memory_space<vmem>>, %arg4: memref<2x128xf32, #tpu.memory_space<vmem>>) attributes {dimension_semantics = [#tpu.dimension_semantics<parallel>], iteration_bounds = array<i64: 1>, scalar_prefetch = 0 : i64, scratch_operands = 0 : i64, tpu.core_type = #tpu.core_type<tc>, window_params = [{transform_indices = @transform_0, window_bounds = array<i64: 2, 16, 32>}, {pipeline_mode = #tpu.pipeline_mode<synchronous>, transform_indices = @transform_1, window_bounds = array<i64: 3, 32, 128>}, {pipeline_mode = #tpu.pipeline_mode<synchronous>, transform_indices = @transform_2, window_bounds = array<i64: 1, 128>}, {transform_indices = @transform_3, window_bounds = array<i64: 2, 128>}]} {
    %c0 = arith.constant 0 : index
    %c0_0 = arith.constant 0 : index
    %c0_1 = arith.constant 0 : index
    %0 = vector.load %arg1[%c0, %c0_0, %c0_1] : memref<2x16x32xbf16, #tpu.memory_space<vmem>>, vector<2x16x32xbf16>
    %1 = vector.shape_cast %0 : vector<2x16x32xbf16> to vector<32x32xbf16>
    %c0_2 = arith.constant 0 : index
    %c0_3 = arith.constant 0 : index
    %c0_4 = arith.constant 0 : index
    %2 = vector.load %arg2[%c0_2, %c0_3, %c0_4] : memref<3x32x128xbf16, #tpu.memory_space<vmem>>, vector<1x32x128xbf16>
    %3 = vector.shape_cast %2 : vector<1x32x128xbf16> to vector<32x128xbf16>
    %cst = arith.constant dense<0.000000e+00> : vector<32x128xf32>
    %4 = tpu.matmul %1, %3, %cst {dimension_numbers = #tpu.dot_dimension_numbers<[1], [0], [0], [1], [0, 0, 1, 1], [], []>} : vector<32x32xbf16>, vector<32x128xbf16>, vector<32x128xf32> -> vector<32x128xf32>
    %5 = vector.shape_cast %4 : vector<32x128xf32> to vector<2x16x128xf32>
    %6 = vector.extract_strided_slice %5 {offsets = [0, 0, 0], sizes = [2, 14, 128], strides = [1, 1, 1]} : vector<2x16x128xf32> to vector<2x14x128xf32>
    %c1 = arith.constant 1 : index
    %c0_5 = arith.constant 0 : index
    %c0_6 = arith.constant 0 : index
    %7 = vector.load %arg2[%c1, %c0_5, %c0_6] : memref<3x32x128xbf16, #tpu.memory_space<vmem>>, vector<1x32x128xbf16>
    %8 = vector.shape_cast %7 : vector<1x32x128xbf16> to vector<32x128xbf16>
    %cst_7 = arith.constant dense<0.000000e+00> : vector<32x128xf32>
    %9 = tpu.matmul %1, %8, %cst_7 {dimension_numbers = #tpu.dot_dimension_numbers<[1], [0], [0], [1], [0, 0, 1, 1], [], []>} : vector<32x32xbf16>, vector<32x128xbf16>, vector<32x128xf32> -> vector<32x128xf32>
    %10 = vector.shape_cast %9 : vector<32x128xf32> to vector<2x16x128xf32>
    %11 = vector.extract_strided_slice %10 {offsets = [0, 1, 0], sizes = [2, 14, 128], strides = [1, 1, 1]} : vector<2x16x128xf32> to vector<2x14x128xf32>
    %12 = arith.addf %6, %11 : vector<2x14x128xf32>
    %c2 = arith.constant 2 : index
    %c0_8 = arith.constant 0 : index
    %c0_9 = arith.constant 0 : index
    %13 = vector.load %arg2[%c2, %c0_8, %c0_9] : memref<3x32x128xbf16, #tpu.memory_space<vmem>>, vector<1x32x128xbf16>
    %14 = vector.shape_cast %13 : vector<1x32x128xbf16> to vector<32x128xbf16>
    %cst_10 = arith.constant dense<0.000000e+00> : vector<32x128xf32>
    %15 = tpu.matmul %1, %14, %cst_10 {dimension_numbers = #tpu.dot_dimension_numbers<[1], [0], [0], [1], [0, 0, 1, 1], [], []>} : vector<32x32xbf16>, vector<32x128xbf16>, vector<32x128xf32> -> vector<32x128xf32>
    %16 = vector.shape_cast %15 : vector<32x128xf32> to vector<2x16x128xf32>
    %17 = vector.extract_strided_slice %16 {offsets = [0, 2, 0], sizes = [2, 14, 128], strides = [1, 1, 1]} : vector<2x16x128xf32> to vector<2x14x128xf32>
    %18 = arith.addf %12, %17 : vector<2x14x128xf32>
    %cst_11 = arith.constant dense<0xFF800000> : vector<2x128xf32>
    %19 = vector.multi_reduction <maximumf>, %18, %cst_11 [1] : vector<2x14x128xf32> to vector<2x128xf32>
    %c0_12 = arith.constant 0 : index
    %c0_13 = arith.constant 0 : index
    %20 = vector.load %arg3[%c0_12, %c0_13] : memref<1x128xf32, #tpu.memory_space<vmem>>, vector<1x128xf32>
    %21 = vector.broadcast %20 : vector<1x128xf32> to vector<2x128xf32>
    %22 = arith.addf %19, %21 : vector<2x128xf32>
    %cst_14 = arith.constant 0.000000e+00 : f32
    %23 = vector.broadcast %cst_14 : f32 to vector<2x128xf32>
    %24 = arith.maximumf %22, %23 : vector<2x128xf32>
    %c0_15 = arith.constant 0 : index
    %c0_16 = arith.constant 0 : index
    %25 = vector.load %arg4[%c0_15, %c0_16] : memref<2x128xf32, #tpu.memory_space<vmem>>, vector<2x128xf32>
    tpu.vector_store %arg4[%c0_15, %c0_16], %24 {strides = array<i32>} : memref<2x128xf32, #tpu.memory_space<vmem>>, vector<2x128xf32>,
    return
  }
  func.func @transform_0(%arg0: i32) -> (i32, i32, i32) {
    %c0_i32 = arith.constant 0 : i32
    %c0_i32_0 = arith.constant 0 : i32
    %c0_i32_1 = arith.constant 0 : i32
    return %arg0, %c0_i32, %c0_i32_0 : i32, i32, i32
  }
  func.func @transform_1(%arg0: i32) -> (i32, i32, i32) {
    %c0_i32 = arith.constant 0 : i32
    %c0_i32_0 = arith.constant 0 : i32
    %c0_i32_1 = arith.constant 0 : i32
    %c0_i32_2 = arith.constant 0 : i32
    return %c0_i32, %c0_i32_0, %c0_i32_1 : i32, i32, i32
  }
  func.func @transform_2(%arg0: i32) -> (i32, i32) {
    %c0_i32 = arith.constant 0 : i32
    %c0_i32_0 = arith.constant 0 : i32
    %c0_i32_1 = arith.constant 0 : i32
    return %c0_i32, %c0_i32_0 : i32, i32
  }
  func.func @transform_3(%arg0: i32) -> (i32, i32) {
    %c0_i32 = arith.constant 0 : i32
    %c0_i32_0 = arith.constant 0 : i32
    return %arg0, %c0_i32 : i32, i32
  }
}

</mosaic_0001>

<llo_original>
// kernel: tpu_custom_call.1
$region0: #{tpu_custom_call.1}
  #allocation0 [shape = 'u32[]', space=smem, size = 0x4, offset = 0x4, fixed_abs, tag = 'smem constant byte address 0x4 - core index']
  #allocation1 [shape = 'u32[144,128]{1,0:T(1,128)}', space=vmem, size = 0x12000, scoped, tag = 'internal scratch']
  %s0 = inlined_call_operand.hbm [shape: bf16[2,16,32], index: 0, kind: input, shape index: {}]
  %s1 = inlined_call_operand.hbm [shape: bf16[3,32,128], index: 1, kind: input, shape index: {}]
  %s2 = inlined_call_operand.vmem [shape: f32[1,128], index: 2, kind: input, shape index: {}]
  %s3 = inlined_call_operand.hbm [shape: f32[2,128], index: 3, kind: output, shape index: {}]
  %s4 = sld [smem:[#allocation0]]
  $region30: #{tpu_custom_call.1} parent=0
    _
  %s6 = ssub.s32 1, %s4
  %s7 = scalar_select 0, %s6, %s4
  $region1: #{tpu_custom_call.1} parent=0
    #allocation2 [shape = 'u8[8192]{0}', space=vmem, size = 0x2000, scoped, tag = 'input window, operand 0, single buffered']
    #allocation3 [shape = 's32[1]{0}', space=sflag, size = 0x4, scoped, tag = 'scoped memory for tpu_custom_call.1']
    #allocation4 [shape = 's32[1]{0}', space=sflag, size = 0x4, scoped, tag = 'scoped memory for tpu_custom_call.1']
    #allocation5 [shape = 'u8[24576]{0}', space=vmem, size = 0x6000, scoped, tag = 'input window, operand 1, single buffered']
    #allocation6 [shape = 's32[1]{0}', space=sflag, size = 0x4, scoped, tag = 'scoped memory for tpu_custom_call.1']
    #allocation7 [shape = 'u8[1024]{0}', space=vmem, size = 0x400, scoped, tag = 'output window, operand 0, single buffered']
    %8 = vsyncpa [#allocation3], 0
    %9 = vsyncpa [#allocation6], 0
    %10 = vsyncpa [#allocation4], 0
    // Predicated region
    $region2: #{tpu_custom_call.1} parent=1 // pred_check
      _
    $region3: #{tpu_custom_call.1} parent=1 // pred_check_branch
      %12 = sbr.rel (0) target = $region5
    $region4: #{tpu_custom_call.1} parent=1 // pred_region
      %s14 = ssub.s32 256, 256
      %15 = vsyncadd [#allocation3], %s14
      %s16 = sshll.u32 [#allocation2], 4
      %s17 = int_to_ptr.vmem [resolvable:$true] %s16
      %22 = dma.hbm_to_vmem [thread:$0]  %s0, 256, %s17, [#allocation3], 64, 64, 4
    $region5: #{tpu_custom_call.1} parent=1 // pred_fallthru
      _
    // Predicated region
    $region6: #{tpu_custom_call.1} parent=1 // pred_check
      _
    $region7: #{tpu_custom_call.1} parent=1 // pred_check_branch
      %24 = sbr.rel (0) target = $region9
    $region8: #{tpu_custom_call.1} parent=1 // pred_region
      %s26 = ssub.s32 768, 768
      %27 = vsyncadd [#allocation6], %s26
      %s28 = sshll.u32 [#allocation5], 4
      %s29 = int_to_ptr.vmem [resolvable:$true] %s28
      %34 = dma.hbm_to_vmem [thread:$0]  %s1, 768, %s29, [#allocation6], 64, 64, 4
    $region9: #{tpu_custom_call.1} parent=1 // pred_fallthru
      _
    // Predicated region
    $region10: #{tpu_custom_call.1} parent=1 // pred_check
      _
    $region11: #{tpu_custom_call.1} parent=1 // pred_check_branch
      %36 = sbr.rel (0) target = $region13
    $region12: #{tpu_custom_call.1} parent=1 // pred_region
      _
    $region13: #{tpu_custom_call.1} parent=1 // pred_fallthru
      _
    // Predicated region
    $region14: #{tpu_custom_call.1} parent=1 // pred_check
      _
    $region15: #{tpu_custom_call.1} parent=1 // pred_check_branch
      %38 = sbr.rel (0) target = $region17
    $region16: #{tpu_custom_call.1} parent=1 // pred_region
      %39 = dma.done [#allocation3], 256
    $region17: #{tpu_custom_call.1} parent=1 // pred_fallthru
      _
    // Predicated region
    $region18: #{tpu_custom_call.1} parent=1 // pred_check
      _
    $region19: #{tpu_custom_call.1} parent=1 // pred_check_branch
      %41 = sbr.rel (0) target = $region21
    $region20: #{tpu_custom_call.1} parent=1 // pred_region
      %42 = dma.done [#allocation6], 768
    $region21: #{tpu_custom_call.1} parent=1 // pred_fallthru
      _
    %v44 = vld [vmem:[#allocation2] sm:$0xf]
    %v45 = vld [vmem:[#allocation2 + $0x4] sm:$0xf]
    %v46 = vld [vmem:[#allocation2 + $0x8] sm:$0xf]
    %v47 = vld [vmem:[#allocation2 + $0xc] sm:$0xf]
    %v48 = vld [vmem:[#allocation5] sm:$0xf]
    %v49 = vld [vmem:[#allocation5 + $0x4] sm:$0xf]
    %v50 = vld [vmem:[#allocation5 + $0x8] sm:$0xf]
    %v51 = vld [vmem:[#allocation5 + $0xc] sm:$0xf]
    %v56 = vunpack.c.l.b16 %v44
    %v57 = vunpack.c.l.b16 %v45
    %v58 = vunpack.c.l.b16 %v46
    %v59 = vunpack.c.l.b16 %v47
    %v60 = vpack.c.b16 %v57, %v56
    %v61 = vpack.c.b16 %v59, %v58
    %v66 = vunpack.c.l.b16 %v48
    %v67 = vunpack.c.l.b16 %v49
    %v68 = vunpack.c.l.b16 %v50
    %v69 = vunpack.c.l.b16 %v51
    %v70 = vpack.c.b16 %v67, %v66
    %v71 = vpack.c.b16 %v69, %v68
    %vm74 = vcmask 261120
    %v76 = vsel %vm74, %v60, 0
    %v79 = vsel %vm74, %v61, 0
    %81 = vmatprep.subr.bf16.mxu0 0
    %82 = vmatpush1.bf16.msra.mxu0 0
    %83 = vmatprep.subr.bf16.mxu0 0
    %84 = vmatpush1.bf16.msra.mxu0 0
    %85 = vmatprep.subr.bf16.mxu0 0
    %86 = vmatpush1.bf16.msra.mxu0 0
    %87 = vmatprep.subr.bf16.mxu0 0
    %88 = vmatpush1.bf16.msra.mxu0 0
    %89 = vmatprep.subr.bf16.mxu0 0
    %90 = vmatpush1.bf16.msra.mxu0 0
    %91 = vmatprep.subr.bf16.mxu0 0
    %92 = vmatpush1.bf16.msra.mxu0 0
    %93 = vmatprep.subr.bf16.mxu0 0
    %94 = vmatpush1.bf16.msra.mxu0 %v71
    %95 = vmatprep.subr.bf16.mxu0 0
    %96 = vmatpush1.bf16.msra.mxu0 %v70
    %97 = vmatprep.subr.bf16.mxu0 0
    %98 = vmatpush2.bf16.msra.mxu0 0
    %99 = vmatprep.subr.bf16.mxu0 0
    %100 = vmatpush2.bf16.msra.mxu0 0
    %101 = vmatprep.subr.bf16.mxu0 0
    %102 = vmatpush2.bf16.msra.mxu0 0
    %103 = vmatprep.subr.bf16.mxu0 0
    %104 = vmatpush2.bf16.msra.mxu0 0
    %105 = vmatprep.subr.bf16.mxu0 0
    %106 = vmatpush2.bf16.msra.mxu0 0
    %107 = vmatprep.subr.bf16.mxu0 0
    %108 = vmatpush2.bf16.msra.mxu0 0
    %109 = vmatprep.subr.bf16.mxu0 0
    %110 = vmatpush2.bf16.msra.mxu0 0
    %111 = vmatprep.subr.bf16.mxu0 0
    %112 = vmatpush2.bf16.msra.mxu0 0
    %113 = vmatprep.mubr.bf16.mxu0 0
    %114 = vmatmul.mubr.bf16.gmra.mxu0 %v76
    %v115 = vpop.f32.mrf.mxu0
    %v116 = vadd.f32 0.0, %v115
    %v117 = vpop.f32.mrf.mxu0
    %v118 = vpop.f32.mrf.mxu0
    %v119 = vadd.f32 0.0, %v118
    %v120 = vpop.f32.mrf.mxu0
    %121 = vmatprep.mubr.bf16.mxu0 0
    %122 = vmatmul.mubr.bf16.gmra.mxu0 %v79
    %v123 = vpop.f32.mrf.mxu0
    %v124 = vadd.f32 0.0, %v123
    %v125 = vpop.f32.mrf.mxu0
    %v126 = vpop.f32.mrf.mxu0
    %v127 = vadd.f32 0.0, %v126
    %v128 = vpop.f32.mrf.mxu0
    %129 = vdwg.mxu0
    %s130 = scalar_lea.vmem [#allocation5], 16
    %v131 = vld [vmem:[%s130] sm:$0xf]
    %v132 = vld [vmem:[%s130 + $0x4] sm:$0xf]
    %v133 = vld [vmem:[%s130 + $0x8] sm:$0xf]
    %v134 = vld [vmem:[%s130 + $0xc] sm:$0xf]
    %v139 = vunpack.c.l.b16 %v131
    %v140 = vunpack.c.l.b16 %v132
    %v141 = vunpack.c.l.b16 %v133
    %v142 = vunpack.c.l.b16 %v134
    %v143 = vpack.c.b16 %v140, %v139
    %v144 = vpack.c.b16 %v142, %v141
    %147 = vmatprep.subr.bf16.mxu0 0
    %148 = vmatpush1.bf16.msra.mxu0 0
    %149 = vmatprep.subr.bf16.mxu0 0
    %150 = vmatpush1.bf16.msra.mxu0 0
    %151 = vmatprep.subr.bf16.mxu0 0
    %152 = vmatpush1.bf16.msra.mxu0 0
    %153 = vmatprep.subr.bf16.mxu0 0
    %154 = vmatpush1.bf16.msra.mxu0 0
    %155 = vmatprep.subr.bf16.mxu0 0
    %156 = vmatpush1.bf16.msra.mxu0 0
    %157 = vmatprep.subr.bf16.mxu0 0
    %158 = vmatpush1.bf16.msra.mxu0 0
    %159 = vmatprep.subr.bf16.mxu0 0
    %160 = vmatpush1.bf16.msra.mxu0 %v144
    %161 = vmatprep.subr.bf16.mxu0 0
    %162 = vmatpush1.bf16.msra.mxu0 %v143
    %163 = vmatprep.subr.bf16.mxu0 0
    %164 = vmatpush2.bf16.msra.mxu0 0
    %165 = vmatprep.subr.bf16.mxu0 0
    %166 = vmatpush2.bf16.msra.mxu0 0
    %167 = vmatprep.subr.bf16.mxu0 0
    %168 = vmatpush2.bf16.msra.mxu0 0
    %169 = vmatprep.subr.bf16.mxu0 0
    %170 = vmatpush2.bf16.msra.mxu0 0
    %171 = vmatprep.subr.bf16.mxu0 0
    %172 = vmatpush2.bf16.msra.mxu0 0
    %173 = vmatprep.subr.bf16.mxu0 0
    %174 = vmatpush2.bf16.msra.mxu0 0
    %175 = vmatprep.subr.bf16.mxu0 0
    %176 = vmatpush2.bf16.msra.mxu0 0
    %177 = vmatprep.subr.bf16.mxu0 0
    %178 = vmatpush2.bf16.msra.mxu0 0
    %179 = vmatprep.mubr.bf16.mxu0 0
    %180 = vmatmul.mubr.bf16.gmra.mxu0 %v76
    %v181 = vpop.f32.mrf.mxu0
    %v182 = vadd.f32 0.0, %v181
    %v183 = vpop.f32.mrf.mxu0
    %v184 = vpop.f32.mrf.mxu0
    %v185 = vadd.f32 0.0, %v184
    %v186 = vpop.f32.mrf.mxu0
    %187 = vmatprep.mubr.bf16.mxu0 0
    %188 = vmatmul.mubr.bf16.gmra.mxu0 %v79
    %v189 = vpop.f32.mrf.mxu0
    %v190 = vadd.f32 0.0, %v189
    %v191 = vpop.f32.mrf.mxu0
    %v192 = vpop.f32.mrf.mxu0
    %v193 = vadd.f32 0.0, %v192
    %v194 = vpop.f32.mrf.mxu0
    %195 = vdwg.mxu0
    %vm200 = vcmask 1046528
    %v201 = vrot.slane %v182, 1
    %v202 = vrot.slane %v185, 1
    %v203 = vsel %vm200, %v201, %v202
    %v204 = vrot.slane %v190, 1
    %v205 = vrot.slane %v193, 1
    %v206 = vsel %vm200, %v204, %v205
    %v211 = vadd.f32 %v116, %v203
    %v212 = vadd.f32 %v119, %v202
    %v213 = vadd.f32 %v124, %v206
    %v214 = vadd.f32 %v127, %v205
    %s215 = scalar_lea.vmem [#allocation5], 32
    %v216 = vld [vmem:[%s215] sm:$0xf]
    %v217 = vld [vmem:[%s215 + $0x4] sm:$0xf]
    %v218 = vld [vmem:[%s215 + $0x8] sm:$0xf]
    %v219 = vld [vmem:[%s215 + $0xc] sm:$0xf]
    %v224 = vunpack.c.l.b16 %v216
    %v225 = vunpack.c.l.b16 %v217
    %v226 = vunpack.c.l.b16 %v218
    %v227 = vunpack.c.l.b16 %v219
    %v228 = vpack.c.b16 %v225, %v224
    %v229 = vpack.c.b16 %v227, %v226
    %232 = vmatprep.subr.bf16.mxu0 0
    %233 = vmatpush1.bf16.msra.mxu0 0
    %234 = vmatprep.subr.bf16.mxu0 0
    %235 = vmatpush1.bf16.msra.mxu0 0
    %236 = vmatprep.subr.bf16.mxu0 0
    %237 = vmatpush1.bf16.msra.mxu0 0
    %238 = vmatprep.subr.bf16.mxu0 0
    %239 = vmatpush1.bf16.msra.mxu0 0
    %240 = vmatprep.subr.bf16.mxu0 0
    %241 = vmatpush1.bf16.msra.mxu0 0
    %242 = vmatprep.subr.bf16.mxu0 0
    %243 = vmatpush1.bf16.msra.mxu0 0
    %244 = vmatprep.subr.bf16.mxu0 0
    %245 = vmatpush1.bf16.msra.mxu0 %v229
    %246 = vmatprep.subr.bf16.mxu0 0
    %247 = vmatpush1.bf16.msra.mxu0 %v228
    %248 = vmatprep.subr.bf16.mxu0 0
    %249 = vmatpush2.bf16.msra.mxu0 0
    %250 = vmatprep.subr.bf16.mxu0 0
    %251 = vmatpush2.bf16.msra.mxu0 0
    %252 = vmatprep.subr.bf16.mxu0 0
    %253 = vmatpush2.bf16.msra.mxu0 0
    %254 = vmatprep.subr.bf16.mxu0 0
    %255 = vmatpush2.bf16.msra.mxu0 0
    %256 = vmatprep.subr.bf16.mxu0 0
    %257 = vmatpush2.bf16.msra.mxu0 0
    %258 = vmatprep.subr.bf16.mxu0 0
    %259 = vmatpush2.bf16.msra.mxu0 0
    %260 = vmatprep.subr.bf16.mxu0 0
    %261 = vmatpush2.bf16.msra.mxu0 0
    %262 = vmatprep.subr.bf16.mxu0 0
    %263 = vmatpush2.bf16.msra.mxu0 0
    %264 = vmatprep.mubr.bf16.mxu0 0
    %265 = vmatmul.mubr.bf16.gmra.mxu0 %v76
    %v266 = vpop.f32.mrf.mxu0
    %v267 = vadd.f32 0.0, %v266
    %v268 = vpop.f32.mrf.mxu0
    %v269 = vpop.f32.mrf.mxu0
    %v270 = vadd.f32 0.0, %v269
    %v271 = vpop.f32.mrf.mxu0
    %272 = vmatprep.mubr.bf16.mxu0 0
    %273 = vmatmul.mubr.bf16.gmra.mxu0 %v79
    %v274 = vpop.f32.mrf.mxu0
    %v275 = vadd.f32 0.0, %v274
    %v276 = vpop.f32.mrf.mxu0
    %v277 = vpop.f32.mrf.mxu0
    %v278 = vadd.f32 0.0, %v277
    %v279 = vpop.f32.mrf.mxu0
    %280 = vdwg.mxu0
    %vm285 = vcmask 1045504
    %v286 = vrot.slane %v267, 2
    %v287 = vrot.slane %v270, 2
    %v288 = vsel %vm285, %v286, %v287
    %v289 = vrot.slane %v275, 2
    %v290 = vrot.slane %v278, 2
    %v291 = vsel %vm285, %v289, %v290
    %v296 = vadd.f32 %v211, %v288
    %v297 = vadd.f32 %v212, %v287
    %v298 = vadd.f32 %v213, %v291
    %v299 = vadd.f32 %v214, %v290
    %v300 = vsel %vm285, %v297, -inf
    %v301 = vmax.f32 %v296, %v300
    %v302 = vrot.slane %v301, 4
    %v303 = vmax.f32 %v301, %v302
    %v304 = vrot.slane %v303, 2
    %v305 = vmax.f32 %v303, %v304
    %v306 = vrot.slane %v305, 1
    %v307 = vmax.f32 %v305, %v306
    %v308 = vsel %vm285, %v299, -inf
    %v309 = vmax.f32 %v298, %v308
    %v310 = vrot.slane %v309, 4
    %v311 = vmax.f32 %v309, %v310
    %v312 = vrot.slane %v311, 2
    %v313 = vmax.f32 %v311, %v312
    %v314 = vrot.slane %v313, 1
    %v315 = vmax.f32 %v313, %v314
    %v316 = vld [vmem:[%s2] sm:$0x1]
    %v318 = vlaneseq
    %v319 = vshrl.u32 %v318, 7
    %v320 = vsub.s32 0, %v319
    %v321 = vrot.slane %v316, %v320
    %v323 = vadd.f32 %v307, %v321
    %v324 = vadd.f32 %v315, %v321
    %v325 = vmax.f32 %v323, 0.0
    %v326 = vmax.f32 %v324, 0.0
    %v329 = vrot.slane %v326, 7
    %vm330 = vcmask 1041409
    %v331 = vsel %vm330, %v329, %v325
    %333 = vst [vmem:[#allocation7] sm:$0x3] %v331
    // Predicated region
    $region22: #{tpu_custom_call.1} parent=1 // pred_check
      _
    $region23: #{tpu_custom_call.1} parent=1 // pred_check_branch
      %335 = sbr.rel (0) target = $region25
    $region24: #{tpu_custom_call.1} parent=1 // pred_region
      %s337 = ssub.s32 32, 32
      %338 = vsyncadd [#allocation4], %s337
      %s340 = sshll.u32 [#allocation7], 4
      %s341 = int_to_ptr.vmem [resolvable:$true] %s340
      %343 = dma.vmem_to_hbm [thread:$0]  %s341, 32, %s3, [#allocation4]
    $region25: #{tpu_custom_call.1} parent=1 // pred_fallthru
      _
    // Predicated region
    $region26: #{tpu_custom_call.1} parent=1 // pred_check
      _
    $region27: #{tpu_custom_call.1} parent=1 // pred_check_branch
      %345 = sbr.rel (0) target = $region29
    $region28: #{tpu_custom_call.1} parent=1 // pred_region
      %346 = dma.done [#allocation4], 32
    $region29: #{tpu_custom_call.1} parent=1 // pred_fallthru
      _
    %347 = vsyncpa [#allocation3], 1
    %348 = vsyncpa [#allocation6], 1
    %349 = vsyncpa [#allocation4], 1

</llo_original>
